<compile_context>
chip_gen: v7x
topology: tpu7x:2x2x1
jax: 0.10.0
libtpu: 0.0.40
codegen_flags: <defaults>
</compile_context>

<pallas_src>
import jax
import jax.numpy as jnp
from jax.experimental import pallas as pl
from jax.experimental.pallas import tpu as pltpu


def _add_pos_kernel(x_ref, pos_ref, o_ref):
    # x_ref: (TB, TL, D), pos_ref: (TL, D), o_ref: (TB, TL, D)
    # Broadcast-add of the positional row block over the leading batch axis.
    o_ref[...] = (x_ref[...] + pos_ref[...]).astype(o_ref.dtype)


def pos_embedding_1d(x, pos_encoding, *, vmem_budget_bytes=8 << 20):
    """Pallas equivalent of PosEmbedding1d.forward: x + pos_encoding[:L]."""
    assert x.ndim == 3, "input must be (Batch, Length, Features)"
    B, L, D = x.shape
    assert pos_encoding.ndim == 2 and pos_encoding.shape[1] == D
    assert pos_encoding.shape[0] >= L, "sequence longer than positional table"

    # Static slice of the learned table (cheap XLA slice, done once, not per batch).
    pos = pos_encoding[:L]
    itemsize = jnp.dtype(x.dtype).itemsize

    def step_bytes(tb, tl):
        # x block + out block (tb*tl*D each) + pos block (tl*D), double-buffered.
        return 2 * itemsize * (2 * tb * tl * D + tl * D)

    # --- Small problem: one grid step, whole tensors as single blocks. ------
    if step_bytes(B, L) <= vmem_budget_bytes:
        return pl.pallas_call(
            _add_pos_kernel,
            out_shape=jax.ShapeDtypeStruct((B, L, D), x.dtype),
            grid=(1,),
            in_specs=[
                pl.BlockSpec((B, L, D), lambda i: (0, 0, 0)),
                pl.BlockSpec((L, D), lambda i: (0, 0)),
            ],
            out_specs=pl.BlockSpec((B, L, D), lambda i: (0, 0, 0)),
            compiler_params=pltpu.CompilerParams(
                dimension_semantics=("arbitrary",)),
        )(x, pos)

    # --- General case: tile the L axis; batch innermost so the pos block ----
    # --- index is unchanged across it and is NOT re-fetched per batch.   ----
    tl = None
    if step_bytes(1, L) <= vmem_budget_bytes:
        tl = L
    else:
        cand = 8
        while cand <= L:
            # Tile rows must be a multiple of 8 (sublane) and divide L exactly.
            if L % cand == 0 and step_bytes(1, cand) <= vmem_budget_bytes:
                tl = cand
            cand += 8
        if tl is None:
            tl = L  # no suitable divisor; fall back to one L block per batch
    num_l = L // tl

    return pl.pallas_call(
        _add_pos_kernel,
        out_shape=jax.ShapeDtypeStruct((B, L, D), x.dtype),
        grid=(num_l, B),
        in_specs=[
            pl.BlockSpec((1, tl, D), lambda l, b: (b, l, 0)),
            pl.BlockSpec((tl, D), lambda l, b: (l, 0)),
        ],
        out_specs=pl.BlockSpec((1, tl, D), lambda l, b: (b, l, 0)),
        compiler_params=pltpu.CompilerParams(
            dimension_semantics=("parallel", "arbitrary")),
    )(x, pos)


if __name__ == "__main__":
    key = jax.random.PRNGKey(0)
    kx, kp = jax.random.split(key)

    batch, seq_len, dim_emb = 2, 16, 128
    num_embeddings = 32  # learned table is longer than the sequence

    x = jax.random.normal(kx, (batch, seq_len, dim_emb), dtype=jnp.float32)
    # nn.Parameter is zeros at init; use small random values to emulate a
    # trained table so the test is non-trivial.
    pos_encoding = 0.02 * jax.random.normal(
        kp, (num_embeddings, dim_emb), dtype=jnp.float32)

    ref = x + pos_encoding[:seq_len]

    # Default path (small problem -> single grid step).
    out = pos_embedding_1d(x, pos_encoding)
    out = jax.block_until_ready(out)
    assert out.shape == (batch, seq_len, dim_emb), out.shape
    assert jnp.allclose(out, ref, atol=1e-6, rtol=1e-6), "mismatch (small path)"

    # Force the tiled path (L tiles of 8 rows, batch innermost) and re-check.
    out_tiled = pos_embedding_1d(x, pos_encoding, vmem_budget_bytes=30_000)
    out_tiled = jax.block_until_ready(out_tiled)
    assert jnp.allclose(out_tiled, ref, atol=1e-6, rtol=1e-6), "mismatch (tiled path)"

    print("KERNEL_OK")
</pallas_src>

<mosaic_0001>
module attributes {stable_mosaic.version = 11 : i64} {
  func.func @_add_pos_kernel(%arg0: i32, %arg1: memref<2x16x128xf32, #tpu.memory_space<vmem>>, %arg2: memref<16x128xf32, #tpu.memory_space<vmem>>, %arg3: memref<2x16x128xf32, #tpu.memory_space<vmem>>) attributes {dimension_semantics = [#tpu.dimension_semantics<arbitrary>], iteration_bounds = array<i64: 1>, scalar_prefetch = 0 : i64, scratch_operands = 0 : i64, tpu.core_type = #tpu.core_type<tc>, window_params = [{pipeline_mode = #tpu.pipeline_mode<synchronous>, transform_indices = @transform_0, window_bounds = array<i64: 2, 16, 128>}, {pipeline_mode = #tpu.pipeline_mode<synchronous>, transform_indices = @transform_1, window_bounds = array<i64: 16, 128>}, {pipeline_mode = #tpu.pipeline_mode<synchronous>, transform_indices = @transform_2, window_bounds = array<i64: 2, 16, 128>}]} {
    %c0 = arith.constant 0 : index
    %c0_0 = arith.constant 0 : index
    %c0_1 = arith.constant 0 : index
    %0 = vector.load %arg1[%c0, %c0_0, %c0_1] : memref<2x16x128xf32, #tpu.memory_space<vmem>>, vector<2x16x128xf32>
    %c0_2 = arith.constant 0 : index
    %c0_3 = arith.constant 0 : index
    %1 = vector.load %arg2[%c0_2, %c0_3] : memref<16x128xf32, #tpu.memory_space<vmem>>, vector<16x128xf32>
    %2 = vector.shape_cast %1 : vector<16x128xf32> to vector<1x16x128xf32>
    %3 = vector.broadcast %2 : vector<1x16x128xf32> to vector<2x16x128xf32>
    %4 = arith.addf %0, %3 : vector<2x16x128xf32>
    %c0_4 = arith.constant 0 : index
    %c0_5 = arith.constant 0 : index
    %c0_6 = arith.constant 0 : index
    %5 = vector.load %arg3[%c0_4, %c0_5, %c0_6] : memref<2x16x128xf32, #tpu.memory_space<vmem>>, vector<2x16x128xf32>
    tpu.vector_store %arg3[%c0_4, %c0_5, %c0_6], %4 {strides = array<i32>} : memref<2x16x128xf32, #tpu.memory_space<vmem>>, vector<2x16x128xf32>,
    return
  }
  func.func @transform_0(%arg0: i32) -> (i32, i32, i32) {
    %c0_i32 = arith.constant 0 : i32
    %c0_i32_0 = arith.constant 0 : i32
    %c0_i32_1 = arith.constant 0 : i32
    %c0_i32_2 = arith.constant 0 : i32
    return %c0_i32, %c0_i32_0, %c0_i32_1 : i32, i32, i32
  }
  func.func @transform_1(%arg0: i32) -> (i32, i32) {
    %c0_i32 = arith.constant 0 : i32
    %c0_i32_0 = arith.constant 0 : i32
    %c0_i32_1 = arith.constant 0 : i32
    return %c0_i32, %c0_i32_0 : i32, i32
  }
  func.func @transform_2(%arg0: i32) -> (i32, i32, i32) {
    %c0_i32 = arith.constant 0 : i32
    %c0_i32_0 = arith.constant 0 : i32
    %c0_i32_1 = arith.constant 0 : i32
    %c0_i32_2 = arith.constant 0 : i32
    return %c0_i32, %c0_i32_0, %c0_i32_1 : i32, i32, i32
  }
}

</mosaic_0001>

<llo_original>
// kernel: tpu_custom_call.1
$region0: #{tpu_custom_call.1}
  #allocation0 [shape = 'u32[]', space=smem, size = 0x4, offset = 0x4, fixed_abs, tag = 'smem constant byte address 0x4 - core index']
  #allocation1 [shape = 'u32[144,128]{1,0:T(1,128)}', space=vmem, size = 0x12000, scoped, tag = 'internal scratch']
  %s0 = inlined_call_operand.hbm [shape: f32[2,16,128], index: 0, kind: input, shape index: {}]
  %s1 = inlined_call_operand.hbm [shape: f32[16,128], index: 1, kind: input, shape index: {}]
  %s2 = inlined_call_operand.hbm [shape: f32[2,16,128], index: 2, kind: output, shape index: {}]
  %s3 = sld [smem:[#allocation0]]
  $region26: #{tpu_custom_call.1} parent=0
    _
  %s5 = ssub.s32 1, %s3
  %s6 = scalar_select 0, %s5, %s3
  $region1: #{tpu_custom_call.1} parent=0
    #allocation2 [shape = 'u8[16384]{0}', space=vmem, size = 0x4000, scoped, tag = 'input window, operand 0, single buffered']
    #allocation3 [shape = 's32[1]{0}', space=sflag, size = 0x4, scoped, tag = 'scoped memory for tpu_custom_call.1']
    #allocation4 [shape = 's32[1]{0}', space=sflag, size = 0x4, scoped, tag = 'scoped memory for tpu_custom_call.1']
    #allocation5 [shape = 'u8[8192]{0}', space=vmem, size = 0x2000, scoped, tag = 'input window, operand 1, single buffered']
    #allocation6 [shape = 's32[1]{0}', space=sflag, size = 0x4, scoped, tag = 'scoped memory for tpu_custom_call.1']
    #allocation7 [shape = 'u8[16384]{0}', space=vmem, size = 0x4000, scoped, tag = 'output window, operand 0, single buffered']
    %7 = vsyncpa [#allocation3], 0
    %8 = vsyncpa [#allocation6], 0
    %9 = vsyncpa [#allocation4], 0
    // Predicated region
    $region2: #{tpu_custom_call.1} parent=1 // pred_check
      _
    $region3: #{tpu_custom_call.1} parent=1 // pred_check_branch
      %11 = sbr.rel (0) target = $region5
    $region4: #{tpu_custom_call.1} parent=1 // pred_region
      %s13 = ssub.s32 512, 512
      %14 = vsyncadd [#allocation3], %s13
      %s15 = sshll.u32 [#allocation2], 4
      %s16 = int_to_ptr.vmem [resolvable:$true] %s15
      %21 = dma.hbm_to_vmem [thread:$0]  %s0, 512, %s16, [#allocation3], 128, 128, 8
    $region5: #{tpu_custom_call.1} parent=1 // pred_fallthru
      _
    // Predicated region
    $region6: #{tpu_custom_call.1} parent=1 // pred_check
      _
    $region7: #{tpu_custom_call.1} parent=1 // pred_check_branch
      %23 = sbr.rel (0) target = $region9
    $region8: #{tpu_custom_call.1} parent=1 // pred_region
      %s25 = ssub.s32 256, 256
      %26 = vsyncadd [#allocation6], %s25
      %s27 = sshll.u32 [#allocation5], 4
      %s28 = int_to_ptr.vmem [resolvable:$true] %s27
      %33 = dma.hbm_to_vmem [thread:$0]  %s1, 256, %s28, [#allocation6], 128, 128, 8
    $region9: #{tpu_custom_call.1} parent=1 // pred_fallthru
      _
    // Predicated region
    $region10: #{tpu_custom_call.1} parent=1 // pred_check
      _
    $region11: #{tpu_custom_call.1} parent=1 // pred_check_branch
      %35 = sbr.rel (0) target = $region13
    $region12: #{tpu_custom_call.1} parent=1 // pred_region
      %36 = dma.done [#allocation3], 512
    $region13: #{tpu_custom_call.1} parent=1 // pred_fallthru
      _
    // Predicated region
    $region14: #{tpu_custom_call.1} parent=1 // pred_check
      _
    $region15: #{tpu_custom_call.1} parent=1 // pred_check_branch
      %38 = sbr.rel (0) target = $region17
    $region16: #{tpu_custom_call.1} parent=1 // pred_region
      %39 = dma.done [#allocation6], 256
    $region17: #{tpu_custom_call.1} parent=1 // pred_fallthru
      _
    %v40 = vld [vmem:[#allocation2] sm:$0xff]
    %v41 = vld [vmem:[#allocation2 + $0x8] sm:$0xff]
    %v42 = vld [vmem:[#allocation2 + $0x10] sm:$0xff]
    %v43 = vld [vmem:[#allocation2 + $0x18] sm:$0xff]
    %v44 = vld [vmem:[#allocation5] sm:$0xff]
    %v45 = vld [vmem:[#allocation5 + $0x8] sm:$0xff]
    %v46 = vadd.f32 %v40, %v44
    %v47 = vadd.f32 %v41, %v45
    %v48 = vadd.f32 %v42, %v44
    %v49 = vadd.f32 %v43, %v45
    %50 = vst [vmem:[#allocation7] sm:$0xff] %v46
    %51 = vst [vmem:[#allocation7 + $0x8] sm:$0xff] %v47
    %52 = vst [vmem:[#allocation7 + $0x10] sm:$0xff] %v48
    %53 = vst [vmem:[#allocation7 + $0x18] sm:$0xff] %v49
    // Predicated region
    $region18: #{tpu_custom_call.1} parent=1 // pred_check
      _
    $region19: #{tpu_custom_call.1} parent=1 // pred_check_branch
      %55 = sbr.rel (0) target = $region21
    $region20: #{tpu_custom_call.1} parent=1 // pred_region
      %s57 = ssub.s32 512, 512
      %58 = vsyncadd [#allocation4], %s57
      %s59 = sshll.u32 [#allocation7], 4
      %s60 = int_to_ptr.vmem [resolvable:$true] %s59
      %65 = dma.vmem_to_hbm [thread:$0]  %s60, 512, %s2, [#allocation4], 128, 128, 8
    $region21: #{tpu_custom_call.1} parent=1 // pred_fallthru
      _
    // Predicated region
    $region22: #{tpu_custom_call.1} parent=1 // pred_check
      _
    $region23: #{tpu_custom_call.1} parent=1 // pred_check_branch
      %67 = sbr.rel (0) target = $region25
    $region24: #{tpu_custom_call.1} parent=1 // pred_region
      %68 = dma.done [#allocation4], 512
    $region25: #{tpu_custom_call.1} parent=1 // pred_fallthru
      _
    %69 = vsyncpa [#allocation3], 1
    %70 = vsyncpa [#allocation6], 1
    %71 = vsyncpa [#allocation4], 1

</llo_original>
